<compile_context>
chip_gen: v6e
topology: v6e:2x2x1
jax: 0.10.0
libtpu: 0.0.40
codegen_flags: <defaults>
</compile_context>

<pallas_src>
import functools
import math

import jax
import jax.numpy as jnp
from jax.experimental import pallas as pl
from jax.experimental.pallas import tpu as pltpu

_LANE = 128        # lane width: intermediate feature dims padded to 128 (dense vregs)
_SUBLANE = 8       # f32 sublane multiple for batch blocks
_SINGLE_BLOCK_MAX_ROWS = 256   # above this, tile batch into >=2 parallel blocks (v7x megacore)


def _round_up(x, m):
    return ((x + m - 1) // m) * m


def _fused_mlp_kernel(*refs, num_layers: int):
    """Entire MLP in one kernel: refs = (x, w0, b0, w1, b1, ..., o).

    Each layer: y = x @ W_t + b ; ReLU on all but the last layer.  The Python
    loop unrolls at trace time; activations never leave VMEM/vregs.  The dot
    runs in the weight dtype (f32 or bf16) with f32 accumulation on the MXU.
    """
    x_ref, o_ref = refs[0], refs[-1]
    wb_refs = refs[1:-1]
    x = x_ref[...].astype(jnp.float32)
    for i in range(num_layers):
        w = wb_refs[2 * i][...]
        b = wb_refs[2 * i + 1][...].astype(jnp.float32)   # (1, Dout) broadcast over batch
        y = jnp.dot(x.astype(w.dtype), w, preferred_element_type=jnp.float32) + b
        x = jnp.maximum(y, 0.0) if i < num_layers - 1 else y
    o_ref[...] = x.astype(o_ref.dtype)
    # TODO(synk): for very large mid_dim, K-tile each layer with a VMEM f32
    # accumulator (pltpu.emit_pipeline) instead of shrinking the batch block.


def prepare_dqn_params(params):
    """Pad params to TPU-friendly shapes ONCE (hoisted out of the forward pass).

    Layout is [in, out] (transpose of torch's [out, in]) so the kernel does
    x @ W_t + b.  Intermediate widths are zero-padded to multiples of 128
    (lane-dense); the first layer's contraction dim and the last layer's output
    dim keep their true sizes (Mosaic pads K in VMEM; true-out_dim output avoids
    16x write amplification).  Zero padding keeps the math identical.
    """
    num_layers = len(params)
    padded = []
    for i, (w_t, b) in enumerate(params):
        din, dout = w_t.shape
        dinp = din if i == 0 else _round_up(din, _LANE)
        doutp = dout if i == num_layers - 1 else _round_up(dout, _LANE)
        wp = jnp.zeros((dinp, doutp), w_t.dtype).at[:din, :dout].set(w_t)
        bp = jnp.zeros((1, doutp), b.dtype).at[:, :dout].set(b)
        padded.append((wp, bp))
    return padded


def _vmem_limit_bytes(padded_params, block_rows, in_dim):
    """Scoped-VMEM budget: resident weights/biases + activations + I/O blocks."""
    wb_bytes = sum(int(w.size) * w.dtype.itemsize + int(b.size) * b.dtype.itemsize
                   for w, b in padded_params)
    widths = [in_dim] + [w.shape[1] for w, _ in padded_params]
    act_bytes = 4 * block_rows * max(widths) * 4     # live f32 activations + buffered x/out blocks
    est = 2 * wb_bytes + act_bytes + (4 << 20)
    return int(max(32 << 20, min(128 << 20, est)))


def dqn_forward(padded_params, states, *, batch_block=512):
    """Fused DQN forward.

    padded_params: output of prepare_dqn_params.  states: [B, in_dim] float.
    Returns action_dist [B, out_dim] float32 (same semantics as the torch module).
    """
    num_layers = len(padded_params)
    B, in_dim = states.shape
    out_dim = padded_params[-1][0].shape[1]
    flat_wb = [t for wb in padded_params for t in wb]
    kernel = functools.partial(_fused_mlp_kernel, num_layers=num_layers)

    if B <= _SINGLE_BLOCK_MAX_ROWS:
        # Grid-less whole-array call: no pipeline prologue/epilogue, no host-side
        # padding at all (Mosaic pads ragged shapes inside VMEM).
        vmem = pl.BlockSpec(memory_space=pltpu.MemorySpace.VMEM)
        limit = _vmem_limit_bytes(padded_params, _round_up(B, _SUBLANE), in_dim)
        return pl.pallas_call(
            kernel,
            out_shape=jax.ShapeDtypeStruct((B, out_dim), jnp.float32),
            in_specs=[vmem] * (1 + 2 * num_layers),
            out_specs=vmem,
            compiler_params=pltpu.CompilerParams(vmem_limit_bytes=limit),
        )(states, *flat_wb)

    # ---- batch-tiled path (large B): >= 2 "parallel" blocks (v7x megacore) ----
    bb = min(batch_block, _round_up(pl.cdiv(B, 2), _SUBLANE))
    bb = max(bb, _SUBLANE)
    grid_n = pl.cdiv(B, bb)
    b_pad = grid_n * bb                      # round UP: no dropped trailing rows
    x = states if b_pad == B else jnp.zeros((b_pad, in_dim), states.dtype).at[:B].set(states)

    # Constant index_map => re-used every step; single-buffer to halve weight VMEM.
    single = pl.Buffered(1)
    in_specs = [pl.BlockSpec((bb, in_dim), lambda i: (i, 0))]
    for w, b in padded_params:
        in_specs.append(pl.BlockSpec(w.shape, lambda i: (0, 0), pipeline_mode=single))
        in_specs.append(pl.BlockSpec(b.shape, lambda i: (0, 0), pipeline_mode=single))

    limit = _vmem_limit_bytes(padded_params, bb, in_dim)
    out = pl.pallas_call(
        kernel,
        out_shape=jax.ShapeDtypeStruct((b_pad, out_dim), jnp.float32),
        grid=(grid_n,),
        in_specs=in_specs,
        out_specs=pl.BlockSpec((bb, out_dim), lambda i: (i, 0)),
        compiler_params=pltpu.CompilerParams(
            dimension_semantics=("parallel",),
            vmem_limit_bytes=limit,
        ),
    )(x, *flat_wb)
    return out[:B]


def init_dqn_params(key, in_dim, mid_dim, out_dim, num_hidden, dtype=jnp.float32):
    """Deterministic init mimicking torch.nn.Linear default (uniform +-1/sqrt(fan_in)).

    Use dtype=jnp.bfloat16 on v6e/v7x to halve weight VMEM/DMA (f32 accumulation
    is kept inside the kernel); f32 here for exact reference checking.
    """
    if num_hidden < 1:
        raise Exception("For now, do at least 1 hidden layer!")
    dims = [(in_dim, mid_dim)] + [(mid_dim, mid_dim)] * num_hidden + [(mid_dim, out_dim)]
    params = []
    for fan_in, fan_out in dims:
        key, kw, kb = jax.random.split(key, 3)
        bound = 1.0 / math.sqrt(fan_in)
        # Stored as [in, out] (transpose of PyTorch's [out, in]) so kernel does x @ W_t.
        w_t = jax.random.uniform(kw, (fan_in, fan_out), jnp.float32, -bound, bound).astype(dtype)
        b = jax.random.uniform(kb, (1, fan_out), jnp.float32, -bound, bound).astype(dtype)
        params.append((w_t, b))
    return params


def _ref_forward(raw_params, x):
    """Pure-JAX reference on the UNPADDED params (checks padding is inert)."""
    for i, (w_t, b) in enumerate(raw_params):
        y = x @ w_t + b
        x = jnp.maximum(y, 0.0) if i < len(raw_params) - 1 else y
    return x


if __name__ == "__main__":
    key = jax.random.PRNGKey(0)

    # Small shapes consistent with the module: DQN(inDim=32, midDim=32, outDim=8, numHidden=2)
    batch = 8
    in_dim, mid_dim, out_dim, num_hidden = 32, 32, 8, 2

    key, kp, kx, kx2 = jax.random.split(key, 4)
    raw_params = init_dqn_params(kp, in_dim, mid_dim, out_dim, num_hidden)
    params = prepare_dqn_params(raw_params)          # padding hoisted: done ONCE here
    states = jax.random.normal(kx, (batch, in_dim), jnp.float32)

    dqn_apply = jax.jit(dqn_forward)
    action_dist = jax.block_until_ready(dqn_apply(params, states))

    assert action_dist.shape == (batch, out_dim)
    assert jnp.allclose(action_dist, _ref_forward(raw_params, states), atol=1e-5, rtol=1e-5)

    # Ragged batch (not a multiple of 8) also needs no host-side padding.
    states2 = jax.random.normal(kx2, (6, in_dim), jnp.float32)
    out2 = jax.block_until_ready(dqn_apply(params, states2))
    assert out2.shape == (6, out_dim)
    assert jnp.allclose(out2, _ref_forward(raw_params, states2), atol=1e-5, rtol=1e-5)

    print("KERNEL_OK")
</pallas_src>

<mosaic_0001>
module attributes {stable_mosaic.version = 11 : i64} {
  func.func @_fused_mlp_kernel(%arg0: memref<8x32xf32, #tpu.memory_space<vmem>>, %arg1: memref<32x128xf32, #tpu.memory_space<vmem>>, %arg2: memref<1x128xf32, #tpu.memory_space<vmem>>, %arg3: memref<128x128xf32, #tpu.memory_space<vmem>>, %arg4: memref<1x128xf32, #tpu.memory_space<vmem>>, %arg5: memref<128x128xf32, #tpu.memory_space<vmem>>, %arg6: memref<1x128xf32, #tpu.memory_space<vmem>>, %arg7: memref<128x8xf32, #tpu.memory_space<vmem>>, %arg8: memref<1x8xf32, #tpu.memory_space<vmem>>, %arg9: memref<8x8xf32, #tpu.memory_space<vmem>>) attributes {dimension_semantics = [], scalar_prefetch = 0 : i64, scratch_operands = 0 : i64, tpu.core_type = #tpu.core_type<tc>} {
    %c0 = arith.constant 0 : index
    %c0_0 = arith.constant 0 : index
    %0 = vector.load %arg0[%c0, %c0_0] : memref<8x32xf32, #tpu.memory_space<vmem>>, vector<8x32xf32>
    %c0_1 = arith.constant 0 : index
    %c0_2 = arith.constant 0 : index
    %1 = vector.load %arg1[%c0_1, %c0_2] : memref<32x128xf32, #tpu.memory_space<vmem>>, vector<32x128xf32>
    %c0_3 = arith.constant 0 : index
    %c0_4 = arith.constant 0 : index
    %2 = vector.load %arg2[%c0_3, %c0_4] : memref<1x128xf32, #tpu.memory_space<vmem>>, vector<1x128xf32>
    %cst = arith.constant dense<0.000000e+00> : vector<8x128xf32>
    %3 = tpu.matmul %0, %1, %cst {dimension_numbers = #tpu.dot_dimension_numbers<[1], [0], [0], [1], [0, 0, 1, 1], [], []>} : vector<8x32xf32>, vector<32x128xf32>, vector<8x128xf32> -> vector<8x128xf32>
    %4 = vector.broadcast %2 : vector<1x128xf32> to vector<8x128xf32>
    %5 = arith.addf %3, %4 : vector<8x128xf32>
    %cst_5 = arith.constant 0.000000e+00 : f32
    %6 = vector.broadcast %cst_5 : f32 to vector<8x128xf32>
    %7 = arith.maximumf %5, %6 : vector<8x128xf32>
    %c0_6 = arith.constant 0 : index
    %c0_7 = arith.constant 0 : index
    %8 = vector.load %arg3[%c0_6, %c0_7] : memref<128x128xf32, #tpu.memory_space<vmem>>, vector<128x128xf32>
    %c0_8 = arith.constant 0 : index
    %c0_9 = arith.constant 0 : index
    %9 = vector.load %arg4[%c0_8, %c0_9] : memref<1x128xf32, #tpu.memory_space<vmem>>, vector<1x128xf32>
    %cst_10 = arith.constant dense<0.000000e+00> : vector<8x128xf32>
    %10 = tpu.matmul %7, %8, %cst_10 {dimension_numbers = #tpu.dot_dimension_numbers<[1], [0], [0], [1], [0, 0, 1, 1], [], []>} : vector<8x128xf32>, vector<128x128xf32>, vector<8x128xf32> -> vector<8x128xf32>
    %11 = vector.broadcast %9 : vector<1x128xf32> to vector<8x128xf32>
    %12 = arith.addf %10, %11 : vector<8x128xf32>
    %cst_11 = arith.constant 0.000000e+00 : f32
    %13 = vector.broadcast %cst_11 : f32 to vector<8x128xf32>
    %14 = arith.maximumf %12, %13 : vector<8x128xf32>
    %c0_12 = arith.constant 0 : index
    %c0_13 = arith.constant 0 : index
    %15 = vector.load %arg5[%c0_12, %c0_13] : memref<128x128xf32, #tpu.memory_space<vmem>>, vector<128x128xf32>
    %c0_14 = arith.constant 0 : index
    %c0_15 = arith.constant 0 : index
    %16 = vector.load %arg6[%c0_14, %c0_15] : memref<1x128xf32, #tpu.memory_space<vmem>>, vector<1x128xf32>
    %cst_16 = arith.constant dense<0.000000e+00> : vector<8x128xf32>
    %17 = tpu.matmul %14, %15, %cst_16 {dimension_numbers = #tpu.dot_dimension_numbers<[1], [0], [0], [1], [0, 0, 1, 1], [], []>} : vector<8x128xf32>, vector<128x128xf32>, vector<8x128xf32> -> vector<8x128xf32>
    %18 = vector.broadcast %16 : vector<1x128xf32> to vector<8x128xf32>
    %19 = arith.addf %17, %18 : vector<8x128xf32>
    %cst_17 = arith.constant 0.000000e+00 : f32
    %20 = vector.broadcast %cst_17 : f32 to vector<8x128xf32>
    %21 = arith.maximumf %19, %20 : vector<8x128xf32>
    %c0_18 = arith.constant 0 : index
    %c0_19 = arith.constant 0 : index
    %22 = vector.load %arg7[%c0_18, %c0_19] : memref<128x8xf32, #tpu.memory_space<vmem>>, vector<128x8xf32>
    %c0_20 = arith.constant 0 : index
    %c0_21 = arith.constant 0 : index
    %23 = vector.load %arg8[%c0_20, %c0_21] : memref<1x8xf32, #tpu.memory_space<vmem>>, vector<1x8xf32>
    %cst_22 = arith.constant dense<0.000000e+00> : vector<8x8xf32>
    %24 = tpu.matmul %21, %22, %cst_22 {dimension_numbers = #tpu.dot_dimension_numbers<[1], [0], [0], [1], [0, 0, 1, 1], [], []>} : vector<8x128xf32>, vector<128x8xf32>, vector<8x8xf32> -> vector<8x8xf32>
    %25 = vector.broadcast %23 : vector<1x8xf32> to vector<8x8xf32>
    %26 = arith.addf %24, %25 : vector<8x8xf32>
    %c0_23 = arith.constant 0 : index
    %c0_24 = arith.constant 0 : index
    %27 = vector.load %arg9[%c0_23, %c0_24] : memref<8x8xf32, #tpu.memory_space<vmem>>, vector<8x8xf32>
    tpu.vector_store %arg9[%c0_23, %c0_24], %26 {strides = array<i32>} : memref<8x8xf32, #tpu.memory_space<vmem>>, vector<8x8xf32>,
    return
  }
}

</mosaic_0001>

<llo_original>
// kernel: dqn_forward.1
$region0: #{dqn_forward.1}
  #allocation0 [shape = 'u32[]', space=smem, size = 0x4, offset = 0x4, fixed_abs, tag = 'smem constant byte address 0x4 - core index']
  #allocation1 [shape = 'u32[144,128]{1,0:T(1,128)}', space=vmem, size = 0x12000, scoped, tag = 'internal scratch']
  %s0 = inlined_call_operand.vmem [shape: f32[8,32], index: 0, kind: input, shape index: {}]
  %s1 = inlined_call_operand.hbm [shape: f32[32,128], index: 1, kind: input, shape index: {}]
  %s2 = inlined_call_operand.vmem [shape: f32[1,128], index: 2, kind: input, shape index: {}]
  %s3 = inlined_call_operand.vmem [shape: f32[128,128], index: 3, kind: input, shape index: {}]
  %s4 = inlined_call_operand.vmem [shape: f32[1,128], index: 4, kind: input, shape index: {}]
  %s5 = inlined_call_operand.hbm [shape: f32[128,128], index: 5, kind: input, shape index: {}]
  %s6 = inlined_call_operand.hbm [shape: f32[1,128], index: 6, kind: input, shape index: {}]
  %s7 = inlined_call_operand.vmem [shape: f32[128,8], index: 7, kind: input, shape index: {}]
  %s8 = inlined_call_operand.vmem [shape: f32[1,8], index: 8, kind: input, shape index: {}]
  %s9 = inlined_call_operand.hbm [shape: f32[8,8], index: 9, kind: output, shape index: {}]
  %s10 = sld [smem:[#allocation0]]
  $region58: #{dqn_forward.1} parent=0
    _
  %s12 = ssub.s32 1, %s10
  %s13 = scalar_select 0, %s12, %s10
  $region1: #{dqn_forward.1} parent=0
    #allocation2 [shape = 'u8[16384]{0}', space=vmem, size = 0x4000, scoped, tag = 'input window, operand 1, single buffered']
    #allocation3 [shape = 's32[1]{0}', space=sflag, size = 0x4, scoped, tag = 'scoped memory for dqn_forward.1']
    #allocation4 [shape = 's32[1]{0}', space=sflag, size = 0x4, scoped, tag = 'scoped memory for dqn_forward.1']
    #allocation5 [shape = 'u8[65536]{0}', space=vmem, size = 0x10000, scoped, tag = 'input window, operand 5, single buffered']
    #allocation6 [shape = 's32[1]{0}', space=sflag, size = 0x4, scoped, tag = 'scoped memory for dqn_forward.1']
    #allocation7 [shape = 'u8[512]{0}', space=vmem, size = 0x400, scoped, tag = 'input window, operand 6, single buffered']
    #allocation8 [shape = 'u8[4096]{0}', space=vmem, size = 0x1000, scoped, tag = 'output window, operand 0, single buffered']
    %14 = vsyncpa [#allocation3], 0
    %15 = vsyncpa [#allocation6], 0
    %16 = vsyncpa [#allocation4], 0
    // Predicated region
    $region2: #{dqn_forward.1} parent=1 // pred_check
      _
    $region3: #{dqn_forward.1} parent=1 // pred_check_branch
      %18 = sbr.rel (0) target = $region5
    $region4: #{dqn_forward.1} parent=1 // pred_region
      _
    $region5: #{dqn_forward.1} parent=1 // pred_fallthru
      _
    // Predicated region
    $region6: #{dqn_forward.1} parent=1 // pred_check
      _
    $region7: #{dqn_forward.1} parent=1 // pred_check_branch
      %20 = sbr.rel (0) target = $region9
    $region8: #{dqn_forward.1} parent=1 // pred_region
      %s22 = ssub.s32 512, 512
      %23 = vsyncadd [#allocation3], %s22
      %s24 = sshll.u32 [#allocation2], 4
      %s25 = int_to_ptr.vmem [resolvable:$true] %s24
      %30 = dma.hbm_to_vmem [thread:$0]  %s1, 512, %s25, [#allocation3], 128, 128, 8
    $region9: #{dqn_forward.1} parent=1 // pred_fallthru
      _
    // Predicated region
    $region10: #{dqn_forward.1} parent=1 // pred_check
      _
    $region11: #{dqn_forward.1} parent=1 // pred_check_branch
      %32 = sbr.rel (0) target = $region13
    $region12: #{dqn_forward.1} parent=1 // pred_region
      _
    $region13: #{dqn_forward.1} parent=1 // pred_fallthru
      _
    // Predicated region
    $region14: #{dqn_forward.1} parent=1 // pred_check
      _
    $region15: #{dqn_forward.1} parent=1 // pred_check_branch
      %34 = sbr.rel (0) target = $region17
    $region16: #{dqn_forward.1} parent=1 // pred_region
      _
    $region17: #{dqn_forward.1} parent=1 // pred_fallthru
      _
    // Predicated region
    $region18: #{dqn_forward.1} parent=1 // pred_check
      _
    $region19: #{dqn_forward.1} parent=1 // pred_check_branch
      %36 = sbr.rel (0) target = $region21
    $region20: #{dqn_forward.1} parent=1 // pred_region
      _
    $region21: #{dqn_forward.1} parent=1 // pred_fallthru
      _
    // Predicated region
    $region22: #{dqn_forward.1} parent=1 // pred_check
      _
    $region23: #{dqn_forward.1} parent=1 // pred_check_branch
      %38 = sbr.rel (0) target = $region25
    $region24: #{dqn_forward.1} parent=1 // pred_region
      %s40 = ssub.s32 2048, 2048
      %41 = vsyncadd [#allocation6], %s40
      %s42 = sshll.u32 [#allocation5], 4
      %s43 = int_to_ptr.vmem [resolvable:$true] %s42
      %48 = dma.hbm_to_vmem [thread:$0]  %s5, 2048, %s43, [#allocation6], 128, 128, 8
    $region25: #{dqn_forward.1} parent=1 // pred_fallthru
      _
    // Predicated region
    $region26: #{dqn_forward.1} parent=1 // pred_check
      _
    $region27: #{dqn_forward.1} parent=1 // pred_check_branch
      %50 = sbr.rel (0) target = $region29
    $region28: #{dqn_forward.1} parent=1 // pred_region
      %s52 = ssub.s32 16, 16
      %53 = vsyncadd [#allocation6], %s52
      %s55 = sshll.u32 [#allocation7], 4
      %s56 = int_to_ptr.vmem [resolvable:$true] %s55
      %58 = dma.hbm_to_vmem [thread:$0]  %s6, 16, %s56, [#allocation6]
    $region29: #{dqn_forward.1} parent=1 // pred_fallthru
      _
    // Predicated region
    $region30: #{dqn_forward.1} parent=1 // pred_check
      _
    $region31: #{dqn_forward.1} parent=1 // pred_check_branch
      %60 = sbr.rel (0) target = $region33
    $region32: #{dqn_forward.1} parent=1 // pred_region
      _
    $region33: #{dqn_forward.1} parent=1 // pred_fallthru
      _
    // Predicated region
    $region34: #{dqn_forward.1} parent=1 // pred_check
      _
    $region35: #{dqn_forward.1} parent=1 // pred_check_branch
      %62 = sbr.rel (0) target = $region37
    $region36: #{dqn_forward.1} parent=1 // pred_region
      _
    $region37: #{dqn_forward.1} parent=1 // pred_fallthru
      _
    // Predicated region
    $region38: #{dqn_forward.1} parent=1 // pred_check
      _
    $region39: #{dqn_forward.1} parent=1 // pred_check_branch
      %64 = sbr.rel (0) target = $region41
    $region40: #{dqn_forward.1} parent=1 // pred_region
      %65 = dma.done [#allocation3], 512
    $region41: #{dqn_forward.1} parent=1 // pred_fallthru
      _
    // Predicated region
    $region42: #{dqn_forward.1} parent=1 // pred_check
      _
    $region43: #{dqn_forward.1} parent=1 // pred_check_branch
      %67 = sbr.rel (0) target = $region45
    $region44: #{dqn_forward.1} parent=1 // pred_region
      %68 = dma.done [#allocation6], 2048
    $region45: #{dqn_forward.1} parent=1 // pred_fallthru
      _
    // Predicated region
    $region46: #{dqn_forward.1} parent=1 // pred_check
      _
    $region47: #{dqn_forward.1} parent=1 // pred_check_branch
      %70 = sbr.rel (0) target = $region49
    $region48: #{dqn_forward.1} parent=1 // pred_region
      %71 = dma.done [#allocation6], 16
    $region49: #{dqn_forward.1} parent=1 // pred_fallthru
      _
    %v72 = vld [vmem:[%s0] sm:$0xff]
    %v73 = vld [vmem:[#allocation2] sm:$0xff]
    %v74 = vld [vmem:[#allocation2 + $0x8] sm:$0xff]
    %v75 = vld [vmem:[#allocation2 + $0x10] sm:$0xff]
    %v76 = vld [vmem:[#allocation2 + $0x18] sm:$0xff]
    %v77 = vld [vmem:[%s2] sm:$0x1]
    %v79 = vlaneseq
    %v80 = vshrl.u32 %v79, 7
    %v81 = vsub.s32 0, %v80
    %v82 = vrot.slane %v77, %v81
    %vm84 = vcmask 261120
    %v86 = vsel %vm84, %v72, 0
    %88 = vmatprep.subr.mxu0 0.0
    %89 = vmatpush1.msra.mxu0 0.0
    %90 = vmatprep.subr.mxu0 0.0
    %91 = vmatpush1.msra.mxu0 0.0
    %92 = vmatprep.subr.mxu0 0.0
    %93 = vmatpush1.msra.mxu0 0.0
    %94 = vmatprep.subr.mxu0 0.0
    %95 = vmatpush1.msra.mxu0 0.0
    %96 = vmatprep.subr.mxu0 0.0
    %97 = vmatpush1.msra.mxu0 0.0
    %98 = vmatprep.subr.mxu0 0.0
    %99 = vmatpush1.msra.mxu0 0.0
    %100 = vmatprep.subr.mxu0 0.0
    %101 = vmatpush1.msra.mxu0 0.0
    %102 = vmatprep.subr.mxu0 0.0
    %103 = vmatpush1.msra.mxu0 0.0
    %104 = vmatprep.subr.mxu0 0.0
    %105 = vmatpush1.msra.mxu0 0.0
    %106 = vmatprep.subr.mxu0 0.0
    %107 = vmatpush1.msra.mxu0 0.0
    %108 = vmatprep.subr.mxu0 0.0
    %109 = vmatpush1.msra.mxu0 0.0
    %110 = vmatprep.subr.mxu0 0.0
    %111 = vmatpush1.msra.mxu0 0.0
    %112 = vmatprep.subr.mxu0 0.0
    %113 = vmatpush1.msra.mxu0 %v76
    %114 = vmatprep.subr.mxu0 0.0
    %115 = vmatpush1.msra.mxu0 %v75
    %116 = vmatprep.subr.mxu0 0.0
    %117 = vmatpush1.msra.mxu0 %v74
    %118 = vmatprep.subr.mxu0 0.0
    %119 = vmatpush1.msra.mxu0 %v73
    %120 = vmatprep.subr.mxu0 0.0
    %121 = vmatpush2.msra.mxu0 0.0
    %122 = vmatprep.subr.mxu0 0.0
    %123 = vmatpush2.msra.mxu0 0.0
    %124 = vmatprep.subr.mxu0 0.0
    %125 = vmatpush2.msra.mxu0 0.0
    %126 = vmatprep.subr.mxu0 0.0
    %127 = vmatpush2.msra.mxu0 0.0
    %128 = vmatprep.subr.mxu0 0.0
    %129 = vmatpush2.msra.mxu0 0.0
    %130 = vmatprep.subr.mxu0 0.0
    %131 = vmatpush2.msra.mxu0 0.0
    %132 = vmatprep.subr.mxu0 0.0
    %133 = vmatpush2.msra.mxu0 0.0
    %134 = vmatprep.subr.mxu0 0.0
    %135 = vmatpush2.msra.mxu0 0.0
    %136 = vmatprep.subr.mxu0 0.0
    %137 = vmatpush2.msra.mxu0 0.0
    %138 = vmatprep.subr.mxu0 0.0
    %139 = vmatpush2.msra.mxu0 0.0
    %140 = vmatprep.subr.mxu0 0.0
    %141 = vmatpush2.msra.mxu0 0.0
    %142 = vmatprep.subr.mxu0 0.0
    %143 = vmatpush2.msra.mxu0 0.0
    %144 = vmatprep.subr.mxu0 0.0
    %145 = vmatpush2.msra.mxu0 0.0
    %146 = vmatprep.subr.mxu0 0.0
    %147 = vmatpush2.msra.mxu0 0.0
    %148 = vmatprep.subr.mxu0 0.0
    %149 = vmatpush2.msra.mxu0 0.0
    %150 = vmatprep.subr.mxu0 0.0
    %151 = vmatpush2.msra.mxu0 0.0
    %152 = vmatprep.mubr.f32.mxu0 0.0
    %153 = vmatmul.mubr.f32.gmra.mxu0 %v86
    %v154 = vpop.f32.mrf.mxu0
    %v155 = vadd.f32 %v82, %v154
    %v156 = vpop.f32.mrf.mxu0
    %157 = vdwg.mxu0
    %v158 = vmax.f32 %v155, 0.0
    %v159 = vld [vmem:[%s3] sm:$0xff]
    %v160 = vld [vmem:[%s3 + $0x8] sm:$0xff]
    %v161 = vld [vmem:[%s3 + $0x10] sm:$0xff]
    %v162 = vld [vmem:[%s3 + $0x18] sm:$0xff]
    %v163 = vld [vmem:[%s3 + $0x20] sm:$0xff]
    %v164 = vld [vmem:[%s3 + $0x28] sm:$0xff]
    %v165 = vld [vmem:[%s3 + $0x30] sm:$0xff]
    %v166 = vld [vmem:[%s3 + $0x38] sm:$0xff]
    %v167 = vld [vmem:[%s3 + $0x40] sm:$0xff]
    %v168 = vld [vmem:[%s3 + $0x48] sm:$0xff]
    %v169 = vld [vmem:[%s3 + $0x50] sm:$0xff]
    %v170 = vld [vmem:[%s3 + $0x58] sm:$0xff]
    %v171 = vld [vmem:[%s3 + $0x60] sm:$0xff]
    %v172 = vld [vmem:[%s3 + $0x68] sm:$0xff]
    %v173 = vld [vmem:[%s3 + $0x70] sm:$0xff]
    %v174 = vld [vmem:[%s3 + $0x78] sm:$0xff]
    %v175 = vld [vmem:[%s4] sm:$0x1]
    %v177 = vlaneseq
    %v178 = vshrl.u32 %v177, 7
    %v179 = vsub.s32 0, %v178
    %v180 = vrot.slane %v175, %v179
    %182 = vmatprep.subr.mxu0 0.0
    %183 = vmatpush1.msra.mxu0 %v174
    %184 = vmatprep.subr.mxu0 0.0
    %185 = vmatpush1.msra.mxu0 %v173
    %186 = vmatprep.subr.mxu0 0.0
    %187 = vmatpush1.msra.mxu0 %v172
    %188 = vmatprep.subr.mxu0 0.0
    %189 = vmatpush1.msra.mxu0 %v171
    %190 = vmatprep.subr.mxu0 0.0
    %191 = vmatpush1.msra.mxu0 %v170
    %192 = vmatprep.subr.mxu0 0.0
    %193 = vmatpush1.msra.mxu0 %v169
    %194 = vmatprep.subr.mxu0 0.0
    %195 = vmatpush1.msra.mxu0 %v168
    %196 = vmatprep.subr.mxu0 0.0
    %197 = vmatpush1.msra.mxu0 %v167
    %198 = vmatprep.subr.mxu0 0.0
    %199 = vmatpush1.msra.mxu0 %v166
    %200 = vmatprep.subr.mxu0 0.0
    %201 = vmatpush1.msra.mxu0 %v165
    %202 = vmatprep.subr.mxu0 0.0
    %203 = vmatpush1.msra.mxu0 %v164
    %204 = vmatprep.subr.mxu0 0.0
    %205 = vmatpush1.msra.mxu0 %v163
    %206 = vmatprep.subr.mxu0 0.0
    %207 = vmatpush1.msra.mxu0 %v162
    %208 = vmatprep.subr.mxu0 0.0
    %209 = vmatpush1.msra.mxu0 %v161
    %210 = vmatprep.subr.mxu0 0.0
    %211 = vmatpush1.msra.mxu0 %v160
    %212 = vmatprep.subr.mxu0 0.0
    %213 = vmatpush1.msra.mxu0 %v159
    %214 = vmatprep.subr.mxu0 0.0
    %215 = vmatpush2.msra.mxu0 0.0
    %216 = vmatprep.subr.mxu0 0.0
    %217 = vmatpush2.msra.mxu0 0.0
    %218 = vmatprep.subr.mxu0 0.0
    %219 = vmatpush2.msra.mxu0 0.0
    %220 = vmatprep.subr.mxu0 0.0
    %221 = vmatpush2.msra.mxu0 0.0
    %222 = vmatprep.subr.mxu0 0.0
    %223 = vmatpush2.msra.mxu0 0.0
    %224 = vmatprep.subr.mxu0 0.0
    %225 = vmatpush2.msra.mxu0 0.0
    %226 = vmatprep.subr.mxu0 0.0
    %227 = vmatpush2.msra.mxu0 0.0
    %228 = vmatprep.subr.mxu0 0.0
    %229 = vmatpush2.msra.mxu0 0.0
    %230 = vmatprep.subr.mxu0 0.0
    %231 = vmatpush2.msra.mxu0 0.0
    %232 = vmatprep.subr.mxu0 0.0
    %233 = vmatpush2.msra.mxu0 0.0
    %234 = vmatprep.subr.mxu0 0.0
    %235 = vmatpush2.msra.mxu0 0.0
    %236 = vmatprep.subr.mxu0 0.0
    %237 = vmatpush2.msra.mxu0 0.0
    %238 = vmatprep.subr.mxu0 0.0
    %239 = vmatpush2.msra.mxu0 0.0
    %240 = vmatprep.subr.mxu0 0.0
    %241 = vmatpush2.msra.mxu0 0.0
    %242 = vmatprep.subr.mxu0 0.0
    %243 = vmatpush2.msra.mxu0 0.0
    %244 = vmatprep.subr.mxu0 0.0
    %245 = vmatpush2.msra.mxu0 0.0
    %246 = vmatprep.mubr.f32.mxu0 0.0
    %247 = vmatmul.mubr.f32.gmra.mxu0 %v158
    %v248 = vpop.f32.mrf.mxu0
    %v249 = vadd.f32 %v180, %v248
    %v250 = vpop.f32.mrf.mxu0
    %251 = vdwg.mxu0
    %v252 = vmax.f32 %v249, 0.0
    %v253 = vld [vmem:[#allocation5] sm:$0xff]
    %v254 = vld [vmem:[#allocation5 + $0x8] sm:$0xff]
    %v255 = vld [vmem:[#allocation5 + $0x10] sm:$0xff]
    %v256 = vld [vmem:[#allocation5 + $0x18] sm:$0xff]
    %v257 = vld [vmem:[#allocation5 + $0x20] sm:$0xff]
    %v258 = vld [vmem:[#allocation5 + $0x28] sm:$0xff]
    %v259 = vld [vmem:[#allocation5 + $0x30] sm:$0xff]
    %v260 = vld [vmem:[#allocation5 + $0x38] sm:$0xff]
    %v261 = vld [vmem:[#allocation5 + $0x40] sm:$0xff]
    %v262 = vld [vmem:[#allocation5 + $0x48] sm:$0xff]
    %v263 = vld [vmem:[#allocation5 + $0x50] sm:$0xff]
    %v264 = vld [vmem:[#allocation5 + $0x58] sm:$0xff]
    %v265 = vld [vmem:[#allocation5 + $0x60] sm:$0xff]
    %v266 = vld [vmem:[#allocation5 + $0x68] sm:$0xff]
    %v267 = vld [vmem:[#allocation5 + $0x70] sm:$0xff]
    %v268 = vld [vmem:[#allocation5 + $0x78] sm:$0xff]
    %v269 = vld [vmem:[#allocation7] sm:$0x1]
    %v271 = vlaneseq
    %v272 = vshrl.u32 %v271, 7
    %v273 = vsub.s32 0, %v272
    %v274 = vrot.slane %v269, %v273
    %276 = vmatprep.subr.mxu0 0.0
    %277 = vmatpush1.msra.mxu0 %v268
    %278 = vmatprep.subr.mxu0 0.0
    %279 = vmatpush1.msra.mxu0 %v267
    %280 = vmatprep.subr.mxu0 0.0
    %281 = vmatpush1.msra.mxu0 %v266
    %282 = vmatprep.subr.mxu0 0.0
    %283 = vmatpush1.msra.mxu0 %v265
    %284 = vmatprep.subr.mxu0 0.0
    %285 = vmatpush1.msra.mxu0 %v264
    %286 = vmatprep.subr.mxu0 0.0
    %287 = vmatpush1.msra.mxu0 %v263
    %288 = vmatprep.subr.mxu0 0.0
    %289 = vmatpush1.msra.mxu0 %v262
    %290 = vmatprep.subr.mxu0 0.0
    %291 = vmatpush1.msra.mxu0 %v261
    %292 = vmatprep.subr.mxu0 0.0
    %293 = vmatpush1.msra.mxu0 %v260
    %294 = vmatprep.subr.mxu0 0.0
    %295 = vmatpush1.msra.mxu0 %v259
    %296 = vmatprep.subr.mxu0 0.0
    %297 = vmatpush1.msra.mxu0 %v258
    %298 = vmatprep.subr.mxu0 0.0
    %299 = vmatpush1.msra.mxu0 %v257
    %300 = vmatprep.subr.mxu0 0.0
    %301 = vmatpush1.msra.mxu0 %v256
    %302 = vmatprep.subr.mxu0 0.0
    %303 = vmatpush1.msra.mxu0 %v255
    %304 = vmatprep.subr.mxu0 0.0
    %305 = vmatpush1.msra.mxu0 %v254
    %306 = vmatprep.subr.mxu0 0.0
    %307 = vmatpush1.msra.mxu0 %v253
    %308 = vmatprep.subr.mxu0 0.0
    %309 = vmatpush2.msra.mxu0 0.0
    %310 = vmatprep.subr.mxu0 0.0
    %311 = vmatpush2.msra.mxu0 0.0
    %312 = vmatprep.subr.mxu0 0.0
    %313 = vmatpush2.msra.mxu0 0.0
    %314 = vmatprep.subr.mxu0 0.0
    %315 = vmatpush2.msra.mxu0 0.0
    %316 = vmatprep.subr.mxu0 0.0
    %317 = vmatpush2.msra.mxu0 0.0
    %318 = vmatprep.subr.mxu0 0.0
    %319 = vmatpush2.msra.mxu0 0.0
    %320 = vmatprep.subr.mxu0 0.0
    %321 = vmatpush2.msra.mxu0 0.0
    %322 = vmatprep.subr.mxu0 0.0
    %323 = vmatpush2.msra.mxu0 0.0
    %324 = vmatprep.subr.mxu0 0.0
    %325 = vmatpush2.msra.mxu0 0.0
    %326 = vmatprep.subr.mxu0 0.0
    %327 = vmatpush2.msra.mxu0 0.0
    %328 = vmatprep.subr.mxu0 0.0
    %329 = vmatpush2.msra.mxu0 0.0
    %330 = vmatprep.subr.mxu0 0.0
    %331 = vmatpush2.msra.mxu0 0.0
    %332 = vmatprep.subr.mxu0 0.0
    %333 = vmatpush2.msra.mxu0 0.0
    %334 = vmatprep.subr.mxu0 0.0
    %335 = vmatpush2.msra.mxu0 0.0
    %336 = vmatprep.subr.mxu0 0.0
    %337 = vmatpush2.msra.mxu0 0.0
    %338 = vmatprep.subr.mxu0 0.0
    %339 = vmatpush2.msra.mxu0 0.0
    %340 = vmatprep.mubr.f32.mxu0 0.0
    %341 = vmatmul.mubr.f32.gmra.mxu0 %v252
    %v342 = vpop.f32.mrf.mxu0
    %v343 = vadd.f32 %v274, %v342
    %v344 = vpop.f32.mrf.mxu0
    %345 = vdwg.mxu0
    %v346 = vmax.f32 %v343, 0.0
    %v347 = vld [vmem:[%s7] sm:$0xff]
    %v348 = vld [vmem:[%s7 + $0x8] sm:$0xff]
    %v349 = vld [vmem:[%s7 + $0x10] sm:$0xff]
    %v350 = vld [vmem:[%s7 + $0x18] sm:$0xff]
    %v351 = vld [vmem:[%s7 + $0x20] sm:$0xff]
    %v352 = vld [vmem:[%s7 + $0x28] sm:$0xff]
    %v353 = vld [vmem:[%s7 + $0x30] sm:$0xff]
    %v354 = vld [vmem:[%s7 + $0x38] sm:$0xff]
    %v355 = vld [vmem:[%s7 + $0x40] sm:$0xff]
    %v356 = vld [vmem:[%s7 + $0x48] sm:$0xff]
    %v357 = vld [vmem:[%s7 + $0x50] sm:$0xff]
    %v358 = vld [vmem:[%s7 + $0x58] sm:$0xff]
    %v359 = vld [vmem:[%s7 + $0x60] sm:$0xff]
    %v360 = vld [vmem:[%s7 + $0x68] sm:$0xff]
    %v361 = vld [vmem:[%s7 + $0x70] sm:$0xff]
    %v362 = vld [vmem:[%s7 + $0x78] sm:$0xff]
    %v363 = vld [vmem:[%s8] sm:$0x1]
    %v365 = vlaneseq
    %v366 = vshrl.u32 %v365, 7
    %v367 = vsub.s32 0, %v366
    %v368 = vrot.slane %v363, %v367
    %370 = vmatprep.subr.mxu0 0.0
    %371 = vmatpush1.msra.mxu0 %v362
    %372 = vmatprep.subr.mxu0 0.0
    %373 = vmatpush1.msra.mxu0 %v361
    %374 = vmatprep.subr.mxu0 0.0
    %375 = vmatpush1.msra.mxu0 %v360
    %376 = vmatprep.subr.mxu0 0.0
    %377 = vmatpush1.msra.mxu0 %v359
    %378 = vmatprep.subr.mxu0 0.0
    %379 = vmatpush1.msra.mxu0 %v358
    %380 = vmatprep.subr.mxu0 0.0
    %381 = vmatpush1.msra.mxu0 %v357
    %382 = vmatprep.subr.mxu0 0.0
    %383 = vmatpush1.msra.mxu0 %v356
    %384 = vmatprep.subr.mxu0 0.0
    %385 = vmatpush1.msra.mxu0 %v355
    %386 = vmatprep.subr.mxu0 0.0
    %387 = vmatpush1.msra.mxu0 %v354
    %388 = vmatprep.subr.mxu0 0.0
    %389 = vmatpush1.msra.mxu0 %v353
    %390 = vmatprep.subr.mxu0 0.0
    %391 = vmatpush1.msra.mxu0 %v352
    %392 = vmatprep.subr.mxu0 0.0
    %393 = vmatpush1.msra.mxu0 %v351
    %394 = vmatprep.subr.mxu0 0.0
    %395 = vmatpush1.msra.mxu0 %v350
    %396 = vmatprep.subr.mxu0 0.0
    %397 = vmatpush1.msra.mxu0 %v349
    %398 = vmatprep.subr.mxu0 0.0
    %399 = vmatpush1.msra.mxu0 %v348
    %400 = vmatprep.subr.mxu0 0.0
    %401 = vmatpush1.msra.mxu0 %v347
    %402 = vmatprep.subr.mxu0 0.0
    %403 = vmatpush2.msra.mxu0 0.0
    %404 = vmatprep.subr.mxu0 0.0
    %405 = vmatpush2.msra.mxu0 0.0
    %406 = vmatprep.subr.mxu0 0.0
    %407 = vmatpush2.msra.mxu0 0.0
    %408 = vmatprep.subr.mxu0 0.0
    %409 = vmatpush2.msra.mxu0 0.0
    %410 = vmatprep.subr.mxu0 0.0
    %411 = vmatpush2.msra.mxu0 0.0
    %412 = vmatprep.subr.mxu0 0.0
    %413 = vmatpush2.msra.mxu0 0.0
    %414 = vmatprep.subr.mxu0 0.0
    %415 = vmatpush2.msra.mxu0 0.0
    %416 = vmatprep.subr.mxu0 0.0
    %417 = vmatpush2.msra.mxu0 0.0
    %418 = vmatprep.subr.mxu0 0.0
    %419 = vmatpush2.msra.mxu0 0.0
    %420 = vmatprep.subr.mxu0 0.0
    %421 = vmatpush2.msra.mxu0 0.0
    %422 = vmatprep.subr.mxu0 0.0
    %423 = vmatpush2.msra.mxu0 0.0
    %424 = vmatprep.subr.mxu0 0.0
    %425 = vmatpush2.msra.mxu0 0.0
    %426 = vmatprep.subr.mxu0 0.0
    %427 = vmatpush2.msra.mxu0 0.0
    %428 = vmatprep.subr.mxu0 0.0
    %429 = vmatpush2.msra.mxu0 0.0
    %430 = vmatprep.subr.mxu0 0.0
    %431 = vmatpush2.msra.mxu0 0.0
    %432 = vmatprep.subr.mxu0 0.0
    %433 = vmatpush2.msra.mxu0 0.0
    %434 = vmatprep.mubr.f32.mxu0 0.0
    %435 = vmatmul.mubr.f32.gmra.mxu0 %v346
    %v436 = vpop.f32.mrf.mxu0
    %v437 = vadd.f32 %v368, %v436
    %v438 = vpop.f32.mrf.mxu0
    %439 = vdwg.mxu0
    %vm440 = vcmask 64512
    %441 = vst.msk [vmem:[#allocation8] sm:$0xff] %vm440, %v437
    // Predicated region
    $region50: #{dqn_forward.1} parent=1 // pred_check
      _
    $region51: #{dqn_forward.1} parent=1 // pred_check_branch
      %443 = sbr.rel (0) target = $region53
    $region52: #{dqn_forward.1} parent=1 // pred_region
      %s445 = ssub.s32 128, 128
      %446 = vsyncadd [#allocation4], %s445
      %s448 = sshll.u32 [#allocation8], 4
      %s449 = int_to_ptr.vmem [resolvable:$true] %s448
      %451 = dma.vmem_to_hbm [thread:$0]  %s449, 128, %s9, [#allocation4]
    $region53: #{dqn_forward.1} parent=1 // pred_fallthru
      _
    // Predicated region
    $region54: #{dqn_forward.1} parent=1 // pred_check
      _
    $region55: #{dqn_forward.1} parent=1 // pred_check_branch
      %453 = sbr.rel (0) target = $region57
    $region56: #{dqn_forward.1} parent=1 // pred_region
      %454 = dma.done [#allocation4], 128
    $region57: #{dqn_forward.1} parent=1 // pred_fallthru
      _
    %455 = vsyncpa [#allocation3], 1
    %456 = vsyncpa [#allocation6], 1
    %457 = vsyncpa [#allocation4], 1

</llo_original>
